<compile_context>
chip_gen: v7x
topology: tpu7x:2x2x1
jax: 0.10.0
libtpu: 0.0.40
codegen_flags: <defaults>
</compile_context>

<pallas_src>
import jax
import jax.numpy as jnp
from jax import lax
from jax.experimental import pallas as pl
from jax.experimental.pallas import tpu as pltpu


def _upsample_matmul_kernel(x_ref, r_ref, o_ref):
    # x_ref: (RB, Kin)   folded input rows (original dtype)
    # r_ref: (Kin, Nout) one-hot block-diagonal replication matrix
    # o_ref: (RB, Nout)  upsampled, lane-dense output rows
    xv = x_ref[...]
    if xv.dtype != r_ref.dtype:
        xv = xv.astype(r_ref.dtype)          # in-kernel widen (no HBM round trip)
    o_ref[...] = jnp.dot(
        xv, r_ref[...], preferred_element_type=jnp.float32
    ).astype(o_ref.dtype)


def _round_up(x, m):
    return ((x + m - 1) // m) * m


def _cdiv(a, b):
    return (a + b - 1) // b


def _sublane_multiple(itemsize):
    return {4: 8, 2: 16, 1: 32}.get(itemsize, 8)


def _device_kind():
    try:
        return jax.devices()[0].device_kind.lower()
    except Exception:
        return ""


def _vmem_budgets():
    kind = _device_kind()
    if kind and "v7" not in kind:
        # 128 MiB VMEM parts (v2..v6): big blocks -> fewer grid steps, big DMAs.
        return 24 * 1024 * 1024, 64 * 1024 * 1024
    # v7x (64 MiB physical / 32 MiB scoped default) or unknown: be conservative.
    return 12 * 1024 * 1024, 32 * 1024 * 1024


def _is_multi_tensorcore():
    kind = _device_kind()
    return any(tag in kind for tag in ("v7", "v4", "v5p"))


def _pick_fold(P, W, Wo, kin_cap, r_item, r_budget, nout_cap=8192):
    """Pick F dividing P: maximize output lane density, prefer Nout >= 128,
    tie-break on smaller Kin; keep R within its VMEM budget."""
    best = None
    max_f = max(1, min(P, kin_cap // max(W, 1)))
    for f in range(1, max_f + 1):
        kin, nout = f * W, f * Wo
        if nout > nout_cap:
            break
        if P % f:
            continue
        r_bytes = 2 * _round_up(kin, 128) * _round_up(nout, 128) * r_item
        if r_bytes > r_budget and f > 1:
            continue
        util = nout / _round_up(nout, 128)
        score = (util, nout >= 128, -kin)
        if best is None or score > best[0]:
            best = (score, f)
    return 1 if best is None else best[1]


def upsample_nearest(x, scale_factor=2):
    """Equivalent of Upsample(scale_factor, mode='nearest').forward(x), NCHW."""
    # TODO(synk): only integer scale_factor with mode='nearest' (the config the
    # tracker's YOLO upsample layers use) is implemented; other interpolate
    # modes / fractional scales are not translated.
    s = int(scale_factor)
    if s != scale_factor or s < 1:
        raise ValueError("integer scale_factor >= 1 required")
    if s == 1:
        return x

    N, C, H, W = x.shape
    H_out, W_out = H * s, W * s

    in_item = jnp.dtype(x.dtype).itemsize
    if in_item > 4:
        # TODO(synk): f64/int64 have no exact MXU path on TPU; plain-JAX fallback.
        return jnp.repeat(jnp.repeat(x, s, axis=2), s, axis=3)

    if x.dtype == jnp.bfloat16:
        cdtype = jnp.bfloat16   # exact: R entries are 0/1, accumulation is f32
        kin_cap = 256           # keeps MXU off the critical path on v7x
    else:
        # f32 / f16 / int8 etc. go through an f32 one-hot matmul (exact copy for
        # floats and for ints with |x| < 2^24).
        cdtype = jnp.float32
        kin_cap = 128           # f32 matmul is multi-pass on the MXU (v5e)

    out_item = in_item
    r_item = jnp.dtype(cdtype).itemsize
    budget, vmem_limit = _vmem_budgets()

    P = N * C * H               # total input rows
    Wo = s * s * W              # output elements produced per input row

    F = _pick_fold(P, W, Wo, kin_cap, r_item, budget // 3)
    Pf = P // F
    Kin = F * W
    Nout = F * Wo

    Kin_p = _round_up(Kin, 128)
    Nout_p = _round_up(Nout, 128)
    r_bytes = 2 * Kin_p * Nout_p * r_item        # double-buffered resident R
    if r_bytes > budget // 2:
        # TODO(synk): pathologically wide feature maps overflow the replication
        # matrix budget; plain-JAX fallback (never hit by the tracker's YOLO).
        return jnp.repeat(jnp.repeat(x, s, axis=2), s, axis=3)

    sub = _sublane_multiple(in_item)

    # Per-step VMEM footprint: double-buffered in/out blocks + f32 accumulator,
    # all padded to (sublane, 128) tiles; R accounted for separately above.
    per_row = 2 * Kin_p * in_item + 2 * Nout_p * out_item + Nout_p * 4
    avail = max(budget - r_bytes, per_row * sub)
    RB = max(sub, ((avail // per_row) // sub) * sub)
    if RB >= Pf:
        RB = Pf                                  # full-extent block always legal
    steps = _cdiv(Pf, RB)

    # Megacore balance: on 2-TensorCore parts keep an even number of grid steps.
    if _is_multi_tensorcore() and steps % 2 == 1 and Pf > sub:
        rb2 = _round_up(_cdiv(Pf, steps + 1), sub)
        if rb2 < Pf and _cdiv(Pf, rb2) % 2 == 0:
            RB = rb2
            steps = _cdiv(Pf, RB)

    # One-hot block-diagonal replication matrix:
    #   R[f*W + w, f*Wo + a*W_out + w*s + b] = 1
    k = lax.broadcasted_iota(jnp.int32, (Kin, Nout), 0)
    c = lax.broadcasted_iota(jnp.int32, (Kin, Nout), 1)
    same_fold = (k // W) == (c // Wo)
    same_col = (k % W) == (((c % Wo) % W_out) // s)
    R = (same_fold & same_col).astype(cdtype)

    x2 = x.reshape(Pf, Kin)                      # contiguous view, original dtype

    cost = pl.CostEstimate(
        flops=2 * Pf * Kin * Nout,
        transcendentals=0,
        bytes_accessed=Pf * Kin * in_item + Pf * Nout * out_item
        + Kin * Nout * r_item,
    )

    out = pl.pallas_call(
        _upsample_matmul_kernel,
        out_shape=jax.ShapeDtypeStruct((Pf, Nout), x.dtype),
        grid_spec=pltpu.PrefetchScalarGridSpec(
            num_scalar_prefetch=0,
            grid=(steps,),
            in_specs=[
                pl.BlockSpec((RB, Kin), lambda p: (p, 0)),     # batched input rows
                pl.BlockSpec((Kin, Nout), lambda p: (0, 0)),   # resident R
            ],
            out_specs=pl.BlockSpec((RB, Nout), lambda p: (p, 0)),
        ),
        compiler_params=pltpu.CompilerParams(
            dimension_semantics=("parallel",),
            vmem_limit_bytes=vmem_limit,
        ),
        cost_estimate=cost,
    )(x2, R)

    # (Pf, F*s*s*W) row-major is exactly (N, C, H_out, W_out) row-major.
    return out.reshape(N, C, H_out, W_out)


if __name__ == "__main__":
    key = jax.random.PRNGKey(0)
    scale = 2

    # Main case: matches the module usage at small shapes.
    N, C, H, W = 2, 4, 16, 16
    x = jax.random.normal(key, (N, C, H, W), dtype=jnp.float32)
    y = jax.block_until_ready(upsample_nearest(x, scale_factor=scale))
    ref = jnp.repeat(jnp.repeat(x, scale, axis=2), scale, axis=3)
    assert y.shape == (N, C, H * scale, W * scale)
    assert jnp.allclose(y, ref, atol=0.0), "mismatch vs nearest-neighbor reference"

    # Odd YOLO-style width: exercises non-power-of-2 fold + ragged last block.
    x2 = jax.random.normal(jax.random.PRNGKey(0), (1, 3, 13, 13), dtype=jnp.float32)
    y2 = jax.block_until_ready(upsample_nearest(x2, scale_factor=scale))
    ref2 = jnp.repeat(jnp.repeat(x2, scale, axis=2), scale, axis=3)
    assert y2.shape == (1, 3, 26, 26)
    assert jnp.allclose(y2, ref2, atol=0.0), "mismatch on odd-width case"

    print("KERNEL_OK")
</pallas_src>

<mosaic_0001>
module attributes {stable_mosaic.version = 11 : i64} {
  func.func @_upsample_matmul_kernel(%arg0: i32, %arg1: memref<64x32xf32, #tpu.memory_space<vmem>>, %arg2: memref<32x128xf32, #tpu.memory_space<vmem>>, %arg3: memref<64x128xf32, #tpu.memory_space<vmem>>) attributes {dimension_semantics = [#tpu.dimension_semantics<parallel>], iteration_bounds = array<i64: 1>, scalar_prefetch = 0 : i64, scratch_operands = 0 : i64, tpu.core_type = #tpu.core_type<tc>, window_params = [{transform_indices = @transform_0, window_bounds = array<i64: 64, 32>}, {pipeline_mode = #tpu.pipeline_mode<synchronous>, transform_indices = @transform_1, window_bounds = array<i64: 32, 128>}, {transform_indices = @transform_2, window_bounds = array<i64: 64, 128>}]} {
    %c0 = arith.constant 0 : index
    %c0_0 = arith.constant 0 : index
    %0 = vector.load %arg1[%c0, %c0_0] : memref<64x32xf32, #tpu.memory_space<vmem>>, vector<64x32xf32>
    %c0_1 = arith.constant 0 : index
    %c0_2 = arith.constant 0 : index
    %1 = vector.load %arg2[%c0_1, %c0_2] : memref<32x128xf32, #tpu.memory_space<vmem>>, vector<32x128xf32>
    %cst = arith.constant dense<0.000000e+00> : vector<64x128xf32>
    %2 = tpu.matmul %0, %1, %cst {dimension_numbers = #tpu.dot_dimension_numbers<[1], [0], [0], [1], [0, 0, 1, 1], [], []>} : vector<64x32xf32>, vector<32x128xf32>, vector<64x128xf32> -> vector<64x128xf32>
    %c0_3 = arith.constant 0 : index
    %c0_4 = arith.constant 0 : index
    %3 = vector.load %arg3[%c0_3, %c0_4] : memref<64x128xf32, #tpu.memory_space<vmem>>, vector<64x128xf32>
    tpu.vector_store %arg3[%c0_3, %c0_4], %2 {strides = array<i32>} : memref<64x128xf32, #tpu.memory_space<vmem>>, vector<64x128xf32>,
    return
  }
  func.func @transform_0(%arg0: i32) -> (i32, i32) {
    %c0_i32 = arith.constant 0 : i32
    %c0_i32_0 = arith.constant 0 : i32
    return %arg0, %c0_i32 : i32, i32
  }
  func.func @transform_1(%arg0: i32) -> (i32, i32) {
    %c0_i32 = arith.constant 0 : i32
    %c0_i32_0 = arith.constant 0 : i32
    %c0_i32_1 = arith.constant 0 : i32
    return %c0_i32, %c0_i32_0 : i32, i32
  }
  func.func @transform_2(%arg0: i32) -> (i32, i32) {
    %c0_i32 = arith.constant 0 : i32
    %c0_i32_0 = arith.constant 0 : i32
    return %arg0, %c0_i32 : i32, i32
  }
}

</mosaic_0001>

<llo_original>
// kernel: tpu_custom_call.1
$region0: #{tpu_custom_call.1}
  #allocation0 [shape = 'u32[]', space=smem, size = 0x4, offset = 0x4, fixed_abs, tag = 'smem constant byte address 0x4 - core index']
  #allocation1 [shape = 'u32[144,128]{1,0:T(1,128)}', space=vmem, size = 0x12000, scoped, tag = 'internal scratch']
  %s0 = inlined_call_operand.hbm [shape: f32[64,32], index: 0, kind: input, shape index: {}]
  %s1 = inlined_call_operand.hbm [shape: f32[32,128], index: 1, kind: input, shape index: {}]
  %s2 = inlined_call_operand.hbm [shape: f32[64,128], index: 2, kind: output, shape index: {}]
  %s3 = sld [smem:[#allocation0]]
  $region26: #{tpu_custom_call.1} parent=0
    _
  %s5 = ssub.s32 1, %s3
  %s6 = scalar_select 0, %s5, %s3
  $region1: #{tpu_custom_call.1} parent=0
    #allocation2 [shape = 'u8[32768]{0}', space=vmem, size = 0x8000, scoped, tag = 'input window, operand 0, single buffered']
    #allocation3 [shape = 's32[1]{0}', space=sflag, size = 0x4, scoped, tag = 'scoped memory for tpu_custom_call.1']
    #allocation4 [shape = 's32[1]{0}', space=sflag, size = 0x4, scoped, tag = 'scoped memory for tpu_custom_call.1']
    #allocation5 [shape = 'u8[16384]{0}', space=vmem, size = 0x4000, scoped, tag = 'input window, operand 1, single buffered']
    #allocation6 [shape = 's32[1]{0}', space=sflag, size = 0x4, scoped, tag = 'scoped memory for tpu_custom_call.1']
    #allocation7 [shape = 'u8[32768]{0}', space=vmem, size = 0x8000, scoped, tag = 'output window, operand 0, single buffered']
    %7 = vsyncpa [#allocation3], 0
    %8 = vsyncpa [#allocation6], 0
    %9 = vsyncpa [#allocation4], 0
    // Predicated region
    $region2: #{tpu_custom_call.1} parent=1 // pred_check
      _
    $region3: #{tpu_custom_call.1} parent=1 // pred_check_branch
      %11 = sbr.rel (0) target = $region5
    $region4: #{tpu_custom_call.1} parent=1 // pred_region
      %s13 = ssub.s32 1024, 1024
      %14 = vsyncadd [#allocation3], %s13
      %s15 = sshll.u32 [#allocation2], 4
      %s16 = int_to_ptr.vmem [resolvable:$true] %s15
      %21 = dma.hbm_to_vmem [thread:$0]  %s0, 1024, %s16, [#allocation3], 128, 128, 8
    $region5: #{tpu_custom_call.1} parent=1 // pred_fallthru
      _
    // Predicated region
    $region6: #{tpu_custom_call.1} parent=1 // pred_check
      _
    $region7: #{tpu_custom_call.1} parent=1 // pred_check_branch
      %23 = sbr.rel (0) target = $region9
    $region8: #{tpu_custom_call.1} parent=1 // pred_region
      %s25 = ssub.s32 512, 512
      %26 = vsyncadd [#allocation6], %s25
      %s27 = sshll.u32 [#allocation5], 4
      %s28 = int_to_ptr.vmem [resolvable:$true] %s27
      %33 = dma.hbm_to_vmem [thread:$0]  %s1, 512, %s28, [#allocation6], 128, 128, 8
    $region9: #{tpu_custom_call.1} parent=1 // pred_fallthru
      _
    // Predicated region
    $region10: #{tpu_custom_call.1} parent=1 // pred_check
      _
    $region11: #{tpu_custom_call.1} parent=1 // pred_check_branch
      %35 = sbr.rel (0) target = $region13
    $region12: #{tpu_custom_call.1} parent=1 // pred_region
      %36 = dma.done [#allocation3], 1024
    $region13: #{tpu_custom_call.1} parent=1 // pred_fallthru
      _
    // Predicated region
    $region14: #{tpu_custom_call.1} parent=1 // pred_check
      _
    $region15: #{tpu_custom_call.1} parent=1 // pred_check_branch
      %38 = sbr.rel (0) target = $region17
    $region16: #{tpu_custom_call.1} parent=1 // pred_region
      %39 = dma.done [#allocation6], 512
    $region17: #{tpu_custom_call.1} parent=1 // pred_fallthru
      _
    %v40 = vld [vmem:[#allocation2] sm:$0xff]
    %v41 = vld [vmem:[#allocation2 + $0x8] sm:$0xff]
    %v42 = vld [vmem:[#allocation2 + $0x10] sm:$0xff]
    %v43 = vld [vmem:[#allocation2 + $0x18] sm:$0xff]
    %v44 = vld [vmem:[#allocation2 + $0x20] sm:$0xff]
    %v45 = vld [vmem:[#allocation2 + $0x28] sm:$0xff]
    %v46 = vld [vmem:[#allocation2 + $0x30] sm:$0xff]
    %v47 = vld [vmem:[#allocation2 + $0x38] sm:$0xff]
    %v48 = vld [vmem:[#allocation5] sm:$0xff]
    %v49 = vld [vmem:[#allocation5 + $0x8] sm:$0xff]
    %v50 = vld [vmem:[#allocation5 + $0x10] sm:$0xff]
    %v51 = vld [vmem:[#allocation5 + $0x18] sm:$0xff]
    %vm52 = vcmask 261120
    %v54 = vsel %vm52, %v40, 0
    %v57 = vsel %vm52, %v41, 0
    %v60 = vsel %vm52, %v42, 0
    %v63 = vsel %vm52, %v43, 0
    %v66 = vsel %vm52, %v44, 0
    %v69 = vsel %vm52, %v45, 0
    %v72 = vsel %vm52, %v46, 0
    %v75 = vsel %vm52, %v47, 0
    %77 = vmatprep.subr.mxu0 0.0
    %78 = vmatpush1.msra.mxu0 %v48
    %79 = vmatprep.subr.mxu0 0.0
    %80 = vmatpush1.msra.mxu0 %v49
    %81 = vmatprep.subr.mxu0 0.0
    %82 = vmatpush1.msra.mxu0 %v50
    %83 = vmatprep.subr.mxu0 0.0
    %84 = vmatpush1.msra.mxu0 %v51
    %85 = vmatprep.subr.mxu0 0.0
    %86 = vmatpush1.msra.mxu0 0.0
    %87 = vmatprep.subr.mxu0 0.0
    %88 = vmatpush1.msra.mxu0 0.0
    %89 = vmatprep.subr.mxu0 0.0
    %90 = vmatpush1.msra.mxu0 0.0
    %91 = vmatprep.subr.mxu0 0.0
    %92 = vmatpush1.msra.mxu0 0.0
    %93 = vmatprep.subr.mxu0 0.0
    %94 = vmatpush1.msra.mxu0 0.0
    %95 = vmatprep.subr.mxu0 0.0
    %96 = vmatpush1.msra.mxu0 0.0
    %97 = vmatprep.subr.mxu0 0.0
    %98 = vmatpush1.msra.mxu0 0.0
    %99 = vmatprep.subr.mxu0 0.0
    %100 = vmatpush1.msra.mxu0 0.0
    %101 = vmatprep.subr.mxu0 0.0
    %102 = vmatpush1.msra.mxu0 0.0
    %103 = vmatprep.subr.mxu0 0.0
    %104 = vmatpush1.msra.mxu0 0.0
    %105 = vmatprep.subr.mxu0 0.0
    %106 = vmatpush1.msra.mxu0 0.0
    %107 = vmatprep.subr.mxu0 0.0
    %108 = vmatpush1.msra.mxu0 0.0
    %109 = vmatprep.subr.mxu0 0.0
    %110 = vmatpush1.msra.mxu0 0.0
    %111 = vmatprep.subr.mxu0 0.0
    %112 = vmatpush1.msra.mxu0 0.0
    %113 = vmatprep.subr.mxu0 0.0
    %114 = vmatpush1.msra.mxu0 0.0
    %115 = vmatprep.subr.mxu0 0.0
    %116 = vmatpush1.msra.mxu0 0.0
    %117 = vmatprep.subr.mxu0 0.0
    %118 = vmatpush1.msra.mxu0 0.0
    %119 = vmatprep.subr.mxu0 0.0
    %120 = vmatpush1.msra.mxu0 0.0
    %121 = vmatprep.subr.mxu0 0.0
    %122 = vmatpush1.msra.mxu0 0.0
    %123 = vmatprep.subr.mxu0 0.0
    %124 = vmatpush1.msra.mxu0 0.0
    %125 = vmatprep.subr.mxu0 0.0
    %126 = vmatpush1.msra.mxu0 0.0
    %127 = vmatprep.subr.mxu0 0.0
    %128 = vmatpush1.msra.mxu0 0.0
    %129 = vmatprep.subr.mxu0 0.0
    %130 = vmatpush1.msra.mxu0 0.0
    %131 = vmatprep.subr.mxu0 0.0
    %132 = vmatpush1.msra.mxu0 0.0
    %133 = vmatprep.subr.mxu0 0.0
    %134 = vmatpush1.msra.mxu0 0.0
    %135 = vmatprep.subr.mxu0 0.0
    %136 = vmatpush1.msra.mxu0 0.0
    %137 = vmatprep.subr.mxu0 0.0
    %138 = vmatpush1.msra.mxu0 0.0
    %139 = vmatprep.subr.mxu0 0.0
    %140 = vmatpush1.msra.mxu0 0.0
    %141 = vmatprep.mubr.f32.mxu0 0.0
    %142 = vmatmul.mubr.f32.gmra.mrb[0].mxu0 %v54
    %v143 = vpop.f32.mrb[0].mxu0
    %v144 = vadd.f32 0.0, %v143
    %v145 = vpop.f32.mrb[0].mxu0
    %146 = vmatprep.mubr.f32.mxu0 0.0
    %147 = vmatmul.mubr.f32.gmra.mrb[0].mxu0 %v57
    %v148 = vpop.f32.mrb[0].mxu0
    %v149 = vadd.f32 0.0, %v148
    %v150 = vpop.f32.mrb[0].mxu0
    %151 = vmatprep.mubr.f32.mxu0 0.0
    %152 = vmatmul.mubr.f32.gmra.mrb[0].mxu0 %v60
    %v153 = vpop.f32.mrb[0].mxu0
    %v154 = vadd.f32 0.0, %v153
    %v155 = vpop.f32.mrb[0].mxu0
    %156 = vmatprep.mubr.f32.mxu0 0.0
    %157 = vmatmul.mubr.f32.gmra.mrb[0].mxu0 %v63
    %v158 = vpop.f32.mrb[0].mxu0
    %v159 = vadd.f32 0.0, %v158
    %v160 = vpop.f32.mrb[0].mxu0
    %161 = vmatprep.mubr.f32.mxu0 0.0
    %162 = vmatmul.mubr.f32.gmra.mrb[0].mxu0 %v66
    %v163 = vpop.f32.mrb[0].mxu0
    %v164 = vadd.f32 0.0, %v163
    %v165 = vpop.f32.mrb[0].mxu0
    %166 = vmatprep.mubr.f32.mxu0 0.0
    %167 = vmatmul.mubr.f32.gmra.mrb[0].mxu0 %v69
    %v168 = vpop.f32.mrb[0].mxu0
    %v169 = vadd.f32 0.0, %v168
    %v170 = vpop.f32.mrb[0].mxu0
    %171 = vmatprep.mubr.f32.mxu0 0.0
    %172 = vmatmul.mubr.f32.gmra.mrb[0].mxu0 %v72
    %v173 = vpop.f32.mrb[0].mxu0
    %v174 = vadd.f32 0.0, %v173
    %v175 = vpop.f32.mrb[0].mxu0
    %176 = vmatprep.mubr.f32.mxu0 0.0
    %177 = vmatmul.mubr.f32.gmra.mrb[0].mxu0 %v75
    %v178 = vpop.f32.mrb[0].mxu0
    %v179 = vadd.f32 0.0, %v178
    %v180 = vpop.f32.mrb[0].mxu0
    %181 = vdwg.mxu0
    %182 = vst [vmem:[#allocation7] sm:$0xff] %v144
    %183 = vst [vmem:[#allocation7 + $0x8] sm:$0xff] %v149
    %184 = vst [vmem:[#allocation7 + $0x10] sm:$0xff] %v154
    %185 = vst [vmem:[#allocation7 + $0x18] sm:$0xff] %v159
    %186 = vst [vmem:[#allocation7 + $0x20] sm:$0xff] %v164
    %187 = vst [vmem:[#allocation7 + $0x28] sm:$0xff] %v169
    %188 = vst [vmem:[#allocation7 + $0x30] sm:$0xff] %v174
    %189 = vst [vmem:[#allocation7 + $0x38] sm:$0xff] %v179
    // Predicated region
    $region18: #{tpu_custom_call.1} parent=1 // pred_check
      _
    $region19: #{tpu_custom_call.1} parent=1 // pred_check_branch
      %191 = sbr.rel (0) target = $region21
    $region20: #{tpu_custom_call.1} parent=1 // pred_region
      %s193 = ssub.s32 1024, 1024
      %194 = vsyncadd [#allocation4], %s193
      %s195 = sshll.u32 [#allocation7], 4
      %s196 = int_to_ptr.vmem [resolvable:$true] %s195
      %201 = dma.vmem_to_hbm [thread:$0]  %s196, 1024, %s2, [#allocation4], 128, 128, 8
    $region21: #{tpu_custom_call.1} parent=1 // pred_fallthru
      _
    // Predicated region
    $region22: #{tpu_custom_call.1} parent=1 // pred_check
      _
    $region23: #{tpu_custom_call.1} parent=1 // pred_check_branch
      %203 = sbr.rel (0) target = $region25
    $region24: #{tpu_custom_call.1} parent=1 // pred_region
      %204 = dma.done [#allocation4], 1024
    $region25: #{tpu_custom_call.1} parent=1 // pred_fallthru
      _
    %205 = vsyncpa [#allocation3], 1
    %206 = vsyncpa [#allocation6], 1
    %207 = vsyncpa [#allocation4], 1

</llo_original>
